<compile_context>
chip_gen: v7x
topology: tpu7x:2x2x1
jax: 0.10.0
libtpu: 0.0.40
codegen_flags: <defaults>
</compile_context>

<pallas_src>
import functools
import math

import jax
import jax.numpy as jnp
import numpy as np
from jax.experimental import pallas as pl
from jax.experimental.pallas import tpu as pltpu


def _msa_emb_kernel(tok_ref, pe_ref, whi_ref, wlo_ref, dq_ref, out_ref, *, d_msa, l2):
    # tok_ref : (R, 1)  int32   packed pair: even_token | ((odd_token + d_msa) << 16)
    # pe_ref  : (l2, D2) f32    positional encoding (+ q_W[1] baked in) for this batch b
    # whi_ref : (2*d_msa, D2) bf16   hi part of block-diagonal embedding table
    # wlo_ref : (2*d_msa, D2) bf16   lo part (residual) of the table
    # dq_ref  : (1, D2) f32     (q_W[0] - q_W[1]) tiled over both lane halves
    # out_ref : (R, D2) f32,    R = tile_n * l2
    r, d2 = out_ref.shape
    tile_n = r // l2

    packed = tok_ref[...]                                          # (R, 1) int32
    t_even = packed & 0xFFFF                                       # even-l token
    t_odd = packed >> 16                                           # odd-l token, already +d_msa

    # one-hot gather of both tokens of the folded pair via bf16 MXU matmuls (exact 0/1)
    # NOTE: the iota is regenerated per step on purpose; staging it in scratch under a
    # "first step" pl.when is unsafe with megacore-parallel grid sharding.
    col = jax.lax.broadcasted_iota(jnp.int32, (r, 2 * d_msa), 1)
    onehot = jnp.logical_or(col == t_even, col == t_odd).astype(jnp.bfloat16)
    emb = jnp.dot(onehot, whi_ref[...], preferred_element_type=jnp.float32)
    emb = emb + jnp.dot(onehot, wlo_ref[...], preferred_element_type=jnp.float32)

    # add the (b,l)-only positional encoding, broadcast over the tile_n sequences
    out = emb.reshape(tile_n, l2, d2) + pe_ref[...][None, :, :]
    out = out.reshape(r, d2)
    out_ref[...] = out

    # query-encoding correction: only the global n == 0 rows (first l2 rows of the first
    # N-tile of each batch) need q_W[0] instead of the q_W[1] baked into pe.  Uses the
    # in-register value (no re-load of out_ref).
    @pl.when(pl.program_id(1) == 0)
    def _():
        out_ref[0:l2, :] = out[0:l2, :] + dq_ref[...]


def prepare_msa_emb_tables(emb_W, q_W):
    """Per-weight-set constants (hoist out of the per-call hot path)."""
    d_msa, d_model = emb_W.shape
    D2 = 2 * d_model
    # block-diagonal table: lanes [0,d_model) <- even-l token, [d_model,2d) <- odd-l token
    W2 = jnp.zeros((2 * d_msa, D2), jnp.float32)
    W2 = W2.at[:d_msa, :d_model].set(emb_W.astype(jnp.float32))
    W2 = W2.at[d_msa:, d_model:].set(emb_W.astype(jnp.float32))
    # bf16 hi/lo split: zeros stay exactly zero so the block-diagonal structure is preserved
    W_hi = W2.astype(jnp.bfloat16)
    W_lo = (W2 - W_hi.astype(jnp.float32)).astype(jnp.bfloat16)
    dq = jnp.tile((q_W[0] - q_W[1]).astype(jnp.float32)[None, :], (1, 2))   # (1, D2)
    return W_hi, W_lo, dq


def _msa_emb_jax(msa, idx, emb_W, q_W):
    """Pure-JAX fallback when 2*d_model is not a multiple of 128 (graceful path)."""
    B, N, L = msa.shape
    d_model = emb_W.shape[1]
    div_term = jnp.exp(jnp.arange(0, d_model, 2, dtype=jnp.float32)
                       * (-math.log(10000.0) / d_model))
    ang = idx.astype(jnp.float32)[..., None] * div_term            # (B, L, ceil(d/2))
    pe = jnp.zeros((B, L, d_model), jnp.float32)
    pe = pe.at[..., 0::2].set(jnp.sin(ang))
    pe = pe.at[..., 1::2].set(jnp.cos(ang)[..., : d_model // 2])
    out = emb_W[msa] + pe[:, None, :, :]
    q = jnp.where((jnp.arange(N) == 0)[None, :, None, None], q_W[0], q_W[1])
    return out + q


def msa_emb_pallas(msa, idx, emb_W, q_W, *, tables=None, block_bytes=2 << 20):
    """msa: (B,N,L) int, idx: (B,L) int. Returns (B,N,L,d_model) float32."""
    B, N, L = msa.shape
    d_msa, d_model = emb_W.shape
    D2 = 2 * d_model

    # Lane-dense stores require D2 % 128 == 0 (d_model a multiple of 64); otherwise the
    # unmasked-vst premise silently breaks -> fall back to plain JAX.
    if D2 % 128 != 0 or d_model % 2 != 0:
        return _msa_emb_jax(msa, idx, emb_W, q_W)

    if tables is None:
        tables = prepare_msa_emb_tables(emb_W, q_W)
    W_hi, W_lo, dq = tables

    # ---- tiling: never pad N (tile_n divides N); pad L only if L % 16 != 0 ----------
    L_pad = L if L % 16 == 0 else ((L + 15) // 16) * 16
    L2 = L_pad // 2                                   # multiple of 8 (sublane alignment)
    row_bytes = D2 * 4
    target_rows = max(8, block_bytes // row_bytes)
    divs = [d for d in range(1, N + 1) if N % d == 0]
    feasible = [d for d in divs if d * L2 <= target_rows] or [1]
    # prefer an even total grid-block count (v7x megacore balance), then the largest tile
    even_ok = [d for d in feasible if (B * (N // d)) % 2 == 0]
    tile_n = max(even_ok) if even_ok else max(feasible)
    R = tile_n * L2                                   # rows per block (multiple of 8)
    n_blocks = N // tile_n

    # ---- wrapper-side glue (tiny compared to the output) ----------------------------
    msa_i = jnp.clip(msa.astype(jnp.int32), 0, d_msa - 1)
    idx_i = idx.astype(jnp.int32)
    if L_pad != L:
        msa_i = jnp.zeros((B, N, L_pad), jnp.int32).at[:, :, :L].set(msa_i)
        idx_i = jnp.zeros((B, L_pad), jnp.int32).at[:, :L].set(idx_i)
    pairs = msa_i.reshape(B, N * L2, 2)
    tok = (pairs[..., 0] | ((pairs[..., 1] + d_msa) << 16))[..., None]    # (B, N*L2, 1)

    # sinusoidal PE rows only for needed positions (B*L rows, N x smaller than the output)
    div_term = jnp.exp(jnp.arange(0, d_model, 2, dtype=jnp.float32)
                       * (-math.log(10000.0) / d_model))
    ang = idx_i[..., None].astype(jnp.float32) * div_term                 # (B, L_pad, d/2)
    pe_rows = jnp.stack([jnp.sin(ang), jnp.cos(ang)], axis=-1).reshape(B, L_pad, d_model)
    pe_rows = pe_rows + q_W[1].astype(jnp.float32)[None, None, :]         # bake "not query" in
    pe2 = pe_rows.reshape(B, L2, D2)                                      # folded to 128·k lanes

    # ---- cost estimate + explicit VMEM budget ----------------------------------------
    total_rows = B * N * L2
    cost = pl.CostEstimate(
        flops=int(2 * 2 * total_rows * (2 * d_msa) * D2),                 # two bf16 matmuls
        transcendentals=0,
        bytes_accessed=int(total_rows * D2 * 4        # output (dominant)
                           + total_rows * 4           # packed tokens
                           + B * L2 * D2 * 4          # positional encoding
                           + W_hi.size * 2 + W_lo.size * 2 + dq.size * 4))

    out_blk = R * D2 * 4
    tok_blk = R * 128 * 4          # (R,1) int32 block is lane-padded to 128 lanes in VMEM
    pe_blk = L2 * D2 * 4
    tbl = W_hi.size * 2 + W_lo.size * 2 + dq.size * 4
    # 2x double-buffered blocks + ~6 out-block-equivalents of in-kernel temporaries + slack;
    # capped at 48 MiB (safe within v7x's 64 MiB physical VMEM, ample on v5e/v6e).
    vmem_need = 2 * (out_blk + tok_blk + pe_blk + tbl) + 6 * out_blk + (4 << 20)
    vmem_limit = int(min(max(vmem_need, 32 << 20), 48 << 20))

    kernel = functools.partial(_msa_emb_kernel, d_msa=d_msa, l2=L2)
    out2 = pl.pallas_call(
        kernel,
        out_shape=jax.ShapeDtypeStruct((B, N * L2, D2), jnp.float32),
        grid_spec=pltpu.PrefetchScalarGridSpec(
            num_scalar_prefetch=0,
            grid=(B, n_blocks),
            in_specs=[
                pl.BlockSpec((None, R, 1), lambda b, nt: (b, nt, 0)),      # packed tokens
                pl.BlockSpec((None, L2, D2), lambda b, nt: (b, 0, 0)),     # PE(+qW[1]); resident across nt
                pl.BlockSpec((2 * d_msa, D2), lambda b, nt: (0, 0)),       # W_hi (bf16)
                pl.BlockSpec((2 * d_msa, D2), lambda b, nt: (0, 0)),       # W_lo (bf16)
                pl.BlockSpec((1, D2), lambda b, nt: (0, 0)),               # qW[0]-qW[1]
            ],
            out_specs=pl.BlockSpec((None, R, D2), lambda b, nt: (b, nt, 0)),
        ),
        compiler_params=pltpu.CompilerParams(
            dimension_semantics=("parallel", "parallel"),
            vmem_limit_bytes=vmem_limit),
        cost_estimate=cost,
    )(tok, pe2, W_hi, W_lo, dq)

    # unfold lanes back to (B, N, L, d_model): pure metadata reshape (no copy)
    out = out2.reshape(B, N, L_pad, d_model)
    if L_pad != L:
        # TODO(synk): this crop re-copies the output; prefer L % 16 == 0 inputs or fuse
        # the crop into the consumer.
        out = out[:, :, :L, :]
    return out


def msa_emb_reference(msa, idx, emb_W, q_W, *, d_model, max_len=5000):
    """Pure-JAX reference matching the PyTorch module (dropout in eval mode)."""
    B, N, L = msa.shape
    position = jnp.arange(max_len, dtype=jnp.float32)[:, None]
    div_term = jnp.exp(jnp.arange(0, d_model, 2, dtype=jnp.float32)
                       * (-math.log(10000.0) / d_model))
    pe = jnp.zeros((max_len, d_model), jnp.float32)
    pe = pe.at[:, 0::2].set(jnp.sin(position * div_term))
    pe = pe.at[:, 1::2].set(jnp.cos(position * div_term))

    out = emb_W[msa]                              # (B,N,L,d)
    out = out + pe[idx][:, None, :, :]            # broadcast over N
    qidx = jnp.where(jnp.arange(N)[None, :, None] == 0, 0, 1)
    qidx = jnp.broadcast_to(qidx, (B, N, L))
    out = out + q_W[qidx]
    return out


if __name__ == "__main__":
    B, N, L = 2, 4, 16
    d_model, d_msa, max_len = 64, 22, 5000

    key = jax.random.PRNGKey(0)
    k1, k2, k3, k4 = jax.random.split(key, 4)

    # deterministic synthetic parameters (nn.Embedding ~ N(0,1))
    emb_W = jax.random.normal(k1, (d_msa, d_model), dtype=jnp.float32)
    q_W = jax.random.normal(k2, (2, d_model), dtype=jnp.float32)

    # inputs
    msa = jax.random.randint(k3, (B, N, L), 0, d_msa, dtype=jnp.int32)
    idx = jax.random.randint(k4, (B, L), 0, 128, dtype=jnp.int32)  # residue indices < max_len

    tables = prepare_msa_emb_tables(emb_W, q_W)   # hoisted per-weight-set constants
    out = msa_emb_pallas(msa, idx, emb_W, q_W, tables=tables)
    out = jax.block_until_ready(out)

    ref = msa_emb_reference(msa, idx, emb_W, q_W, d_model=d_model, max_len=max_len)
    # bf16 hi/lo split of the embedding table bounds the error at ~2^-18 relative
    np.testing.assert_allclose(np.asarray(out), np.asarray(ref), rtol=1e-4, atol=5e-5)

    print("KERNEL_OK")
</pallas_src>

<mosaic_0001>
module attributes {stable_mosaic.version = 11 : i64} {
  func.func @_msa_emb_kernel(%arg0: i32, %arg1: i32, %arg2: memref<1x32x1xi32, #tpu.memory_space<vmem>>, %arg3: memref<1x8x128xf32, #tpu.memory_space<vmem>>, %arg4: memref<44x128xbf16, #tpu.memory_space<vmem>>, %arg5: memref<44x128xbf16, #tpu.memory_space<vmem>>, %arg6: memref<1x128xf32, #tpu.memory_space<vmem>>, %arg7: memref<1x32x128xf32, #tpu.memory_space<vmem>>) attributes {dimension_semantics = [#tpu.dimension_semantics<parallel>, #tpu.dimension_semantics<parallel>], iteration_bounds = array<i64: 2, 1>, scalar_prefetch = 0 : i64, scratch_operands = 0 : i64, tpu.core_type = #tpu.core_type<tc>, window_params = [{transform_indices = @transform_0, window_bounds = array<i64: 1, 32, 1>}, {transform_indices = @transform_1, window_bounds = array<i64: 1, 8, 128>}, {pipeline_mode = #tpu.pipeline_mode<synchronous>, transform_indices = @transform_2, window_bounds = array<i64: 44, 128>}, {pipeline_mode = #tpu.pipeline_mode<synchronous>, transform_indices = @transform_3, window_bounds = array<i64: 44, 128>}, {pipeline_mode = #tpu.pipeline_mode<synchronous>, transform_indices = @transform_4, window_bounds = array<i64: 1, 128>}, {transform_indices = @transform_5, window_bounds = array<i64: 1, 32, 128>}]} {
    %c0 = arith.constant 0 : index
    %c0_0 = arith.constant 0 : index
    %c0_1 = arith.constant 0 : index
    %0 = vector.load %arg2[%c0, %c0_0, %c0_1] : memref<1x32x1xi32, #tpu.memory_space<vmem>>, vector<1x32x1xi32>
    %1 = vector.shape_cast %0 : vector<1x32x1xi32> to vector<32x1xi32>
    %c65535_i32 = arith.constant 65535 : i32
    %2 = vector.broadcast %c65535_i32 : i32 to vector<32x1xi32>
    %3 = arith.andi %1, %2 : vector<32x1xi32>
    %c16_i32 = arith.constant 16 : i32
    %4 = vector.broadcast %c16_i32 : i32 to vector<32x1xi32>
    %5 = arith.shrsi %1, %4 : vector<32x1xi32>
    %6 = tpu.iota {dimensions = array<i32: 1>} : vector<32x44xi32>
    %7 = vector.broadcast %3 : vector<32x1xi32> to vector<32x44xi32>
    %8 = arith.cmpi eq, %6, %7 : vector<32x44xi32>
    %9 = vector.broadcast %5 : vector<32x1xi32> to vector<32x44xi32>
    %10 = arith.cmpi eq, %6, %9 : vector<32x44xi32>
    %11 = arith.ori %8, %10 : vector<32x44xi1>
    %12 = arith.extui %11 : vector<32x44xi1> to vector<32x44xi32>
    %13 = arith.sitofp %12 : vector<32x44xi32> to vector<32x44xf32>
    %14 = arith.truncf %13 : vector<32x44xf32> to vector<32x44xbf16>
    %c0_2 = arith.constant 0 : index
    %c0_3 = arith.constant 0 : index
    %15 = vector.load %arg4[%c0_2, %c0_3] : memref<44x128xbf16, #tpu.memory_space<vmem>>, vector<44x128xbf16>
    %cst = arith.constant dense<0.000000e+00> : vector<32x128xf32>
    %16 = tpu.matmul %14, %15, %cst {dimension_numbers = #tpu.dot_dimension_numbers<[1], [0], [0], [1], [0, 0, 1, 1], [], []>} : vector<32x44xbf16>, vector<44x128xbf16>, vector<32x128xf32> -> vector<32x128xf32>
    %c0_4 = arith.constant 0 : index
    %c0_5 = arith.constant 0 : index
    %17 = vector.load %arg5[%c0_4, %c0_5] : memref<44x128xbf16, #tpu.memory_space<vmem>>, vector<44x128xbf16>
    %cst_6 = arith.constant dense<0.000000e+00> : vector<32x128xf32>
    %18 = tpu.matmul %14, %17, %cst_6 {dimension_numbers = #tpu.dot_dimension_numbers<[1], [0], [0], [1], [0, 0, 1, 1], [], []>} : vector<32x44xbf16>, vector<44x128xbf16>, vector<32x128xf32> -> vector<32x128xf32>
    %19 = arith.addf %16, %18 : vector<32x128xf32>
    %20 = vector.shape_cast %19 : vector<32x128xf32> to vector<4x8x128xf32>
    %c0_7 = arith.constant 0 : index
    %c0_8 = arith.constant 0 : index
    %c0_9 = arith.constant 0 : index
    %21 = vector.load %arg3[%c0_7, %c0_8, %c0_9] : memref<1x8x128xf32, #tpu.memory_space<vmem>>, vector<1x8x128xf32>
    %22 = vector.shape_cast %21 : vector<1x8x128xf32> to vector<8x128xf32>
    %23 = vector.shape_cast %22 : vector<8x128xf32> to vector<1x8x128xf32>
    %24 = vector.broadcast %23 : vector<1x8x128xf32> to vector<4x8x128xf32>
    %25 = arith.addf %20, %24 : vector<4x8x128xf32>
    %26 = vector.shape_cast %25 : vector<4x8x128xf32> to vector<32x128xf32>
    %c0_10 = arith.constant 0 : index
    %c0_11 = arith.constant 0 : index
    %c0_12 = arith.constant 0 : index
    %27 = vector.load %arg7[%c0_10, %c0_11, %c0_12] : memref<1x32x128xf32, #tpu.memory_space<vmem>>, vector<1x32x128xf32>
    %28 = vector.shape_cast %27 : vector<1x32x128xf32> to vector<32x128xf32>
    %29 = vector.shape_cast %26 : vector<32x128xf32> to vector<1x32x128xf32>
    tpu.vector_store %arg7[%c0_10, %c0_11, %c0_12], %29 {strides = array<i32>} : memref<1x32x128xf32, #tpu.memory_space<vmem>>, vector<1x32x128xf32>,
    %c0_i32 = arith.constant 0 : i32
    %30 = arith.cmpi eq, %arg1, %c0_i32 : i32
    %31 = arith.extui %30 : i1 to i32
    %c0_i32_13 = arith.constant 0 : i32
    %32 = arith.cmpi ne, %31, %c0_i32_13 : i32
    scf.if %32 {
      %33 = vector.extract_strided_slice %26 {offsets = [0, 0], sizes = [8, 128], strides = [1, 1]} : vector<32x128xf32> to vector<8x128xf32>
      %c0_14 = arith.constant 0 : index
      %c0_15 = arith.constant 0 : index
      %34 = vector.load %arg6[%c0_14, %c0_15] : memref<1x128xf32, #tpu.memory_space<vmem>>, vector<1x128xf32>
      %35 = vector.broadcast %34 : vector<1x128xf32> to vector<8x128xf32>
      %36 = arith.addf %33, %35 : vector<8x128xf32>
      %c0_16 = arith.constant 0 : index
      %c0_17 = arith.constant 0 : index
      %c0_18 = arith.constant 0 : index
      %37 = vector.load %arg7[%c0_16, %c0_17, %c0_18] : memref<1x32x128xf32, #tpu.memory_space<vmem>>, vector<1x8x128xf32>
      %38 = vector.shape_cast %37 : vector<1x8x128xf32> to vector<8x128xf32>
      %39 = vector.shape_cast %36 : vector<8x128xf32> to vector<1x8x128xf32>
      tpu.vector_store %arg7[%c0_16, %c0_17, %c0_18], %39 {strides = array<i32>} : memref<1x32x128xf32, #tpu.memory_space<vmem>>, vector<1x8x128xf32>,
    } else {
    }
    return
  }
  func.func @transform_0(%arg0: i32, %arg1: i32) -> (i32, i32, i32) {
    %c0_i32 = arith.constant 0 : i32
    %c0_i32_0 = arith.constant 0 : i32
    return %arg0, %arg1, %c0_i32 : i32, i32, i32
  }
  func.func @transform_1(%arg0: i32, %arg1: i32) -> (i32, i32, i32) {
    %c0_i32 = arith.constant 0 : i32
    %c0_i32_0 = arith.constant 0 : i32
    %c0_i32_1 = arith.constant 0 : i32
    return %arg0, %c0_i32, %c0_i32_0 : i32, i32, i32
  }
  func.func @transform_2(%arg0: i32, %arg1: i32) -> (i32, i32) {
    %c0_i32 = arith.constant 0 : i32
    %c0_i32_0 = arith.constant 0 : i32
    %c0_i32_1 = arith.constant 0 : i32
    return %c0_i32, %c0_i32_0 : i32, i32
  }
  func.func @transform_3(%arg0: i32, %arg1: i32) -> (i32, i32) {
    %c0_i32 = arith.constant 0 : i32
    %c0_i32_0 = arith.constant 0 : i32
    %c0_i32_1 = arith.constant 0 : i32
    return %c0_i32, %c0_i32_0 : i32, i32
  }
  func.func @transform_4(%arg0: i32, %arg1: i32) -> (i32, i32) {
    %c0_i32 = arith.constant 0 : i32
    %c0_i32_0 = arith.constant 0 : i32
    %c0_i32_1 = arith.constant 0 : i32
    return %c0_i32, %c0_i32_0 : i32, i32
  }
  func.func @transform_5(%arg0: i32, %arg1: i32) -> (i32, i32, i32) {
    %c0_i32 = arith.constant 0 : i32
    %c0_i32_0 = arith.constant 0 : i32
    return %arg0, %arg1, %c0_i32 : i32, i32, i32
  }
}

</mosaic_0001>

<llo_original>
// kernel: tpu_custom_call.1
$region0: #{tpu_custom_call.1}
  #allocation0 [shape = 'u32[]', space=smem, size = 0x4, offset = 0x4, fixed_abs, tag = 'smem constant byte address 0x4 - core index']
  #allocation1 [shape = 'u32[144,128]{1,0:T(1,128)}', space=vmem, size = 0x12000, scoped, tag = 'internal scratch']
  %s0 = inlined_call_operand.vmem [shape: s32[2,32,1], index: 0, kind: input, shape index: {}]
  %s1 = inlined_call_operand.vmem [shape: f32[2,8,128], index: 1, kind: input, shape index: {}]
  %s2 = inlined_call_operand.vmem [shape: bf16[44,128], index: 2, kind: input, shape index: {}]
  %s3 = inlined_call_operand.vmem [shape: bf16[44,128], index: 3, kind: input, shape index: {}]
  %s4 = inlined_call_operand.vmem [shape: f32[1,128], index: 4, kind: input, shape index: {}]
  %s5 = inlined_call_operand.hbm [shape: f32[2,32,128], index: 5, kind: output, shape index: {}]
  %s6 = sld [smem:[#allocation0]]
  $region57: #{tpu_custom_call.1} parent=0
    _
  %s8 = ssub.s32 1, %s6
  %s9 = scalar_select 0, %s8, %s6
  $region1: #{tpu_custom_call.1} parent=0
    #allocation2 [shape = 'u8[32768]{0}', space=vmem, size = 0x8000, scoped, tag = 'output window, operand 0']
    #allocation3 [shape = 's32[2]{0}', space=sflag, size = 0x8, scoped, tag = 'scoped memory for tpu_custom_call.1']
    %10 = vsyncpa [#allocation3], 0
    %s11 = scalar_lea.sflag [#allocation3], 1
    %12 = vsyncpa %s11, 0
    loop: start=0, step=1, limit=4
    $region2: #{tpu_custom_call.1} parent=1 // loop_pre_header
      _
    $region3: #{tpu_custom_call.1} parent=1 // loop_header
      %s14 = sphi 0, %s18
      %p15 = scmp.ge.s32.totalorder %s14, 4
      %s21 = sphi 0, %s33
      %s22 = sphi 0, %s29
      %s23 = sphi 0, %s21
      %s24 = sphi 0, %s22
      %s25 = sphi 0, %s23
      %s26 = sphi 0, %s24
      %s38 = sphi 0, %s40
      %s41 = sphi 0, %s38
      %s42 = sphi 0, %s41
      %s58 = sphi 0, %s42
      %s64 = sphi 0, %s66
      %s67 = sphi 0, %s64
      %s68 = sphi 0, %s67
      %s84 = sphi 0, %s68
      %s88 = sphi 0, %s88
      %s90 = sphi 0, %s88
      %s91 = sphi 0, %s90
      %s105 = sphi 0, %s91
      %s109 = sphi 0, %s109
      %s111 = sphi 0, %s109
      %s112 = sphi 0, %s111
      %s126 = sphi 0, %s112
      %s130 = sphi 0, %s130
      %s132 = sphi 0, %s130
      %s133 = sphi 0, %s132
      %s147 = sphi 0, %s133
      %s155 = sphi 0, %s157
      %s158 = sphi 0, %s155
      %s159 = sphi 0, %s158
      %s175 = sphi 0, %s159
    $region4: #{tpu_custom_call.1} parent=1 // loop_header_branch
      %17 = sbr.rel (%p15) target = $region8
    $region5: #{tpu_custom_call.1} parent=1 // loop_body
      %s19 = ssub.s32 %s14, 1
      %s20 = ssub.s32 %s14, 2
      %s27 = sadd.s32 1, %s22
      %p28 = scmp.ge.s32.totalorder %s27, 1
      %s29 = scalar_select %p28, 0, %s27
      %s30 = sadd.s32 1, %s21
      %s31 = scalar_select %p28, %s30, %s21
      %p32 = scmp.ge.s32.totalorder %s31, 2
      %s33 = scalar_select %p32, 0, %s31
      %s34 = ssub.s32 %s21, %s33
      %s35 = ssub.s32 %s22, %s29
      %s36 = sor.u32 %s34, %s35
      %p37 = scmp.eq.s32.totalorder %s36, 0
      %s39 = sadd.s32 %s38, 1
      %s40 = scalar_select %p37, %s38, %s39
      %p43 = pneg %p37
      %p44 = scmp.eq.s32.totalorder %s14, 1
      %p45 = por %p43, %p44
      %p46 = scmp.ne.s32.totalorder %s38, %s41
      %p47 = scmp.eq.s32.totalorder %s14, 0
      %p48 = por %p46, %p47
      %p49 = scmp.ne.s32.totalorder %s38, %s41
      %p50 = scmp.eq.s32.totalorder %s19, 1
      %p51 = por %p49, %p50
      %p52 = scmp.ne.s32.totalorder %s41, %s42
      %p53 = scmp.eq.s32.totalorder %s19, 0
      %p54 = por %p52, %p53
      %p55 = scmp.ne.s32.totalorder %s41, %s42
      %p56 = scmp.eq.s32.totalorder %s20, 1
      %p57 = por %p55, %p56
      %p59 = scmp.ne.s32.totalorder %s42, %s58
      %p60 = scmp.eq.s32.totalorder %s20, 0
      %p61 = por %p59, %p60
      %s62 = ssub.s32 %s21, %s33
      %p63 = scmp.eq.s32.totalorder %s62, 0
      %s65 = sadd.s32 %s64, 1
      %s66 = scalar_select %p63, %s64, %s65
      %p69 = pneg %p63
      %p70 = scmp.eq.s32.totalorder %s14, 1
      %p71 = por %p69, %p70
      %p72 = scmp.ne.s32.totalorder %s64, %s67
      %p73 = scmp.eq.s32.totalorder %s14, 0
      %p74 = por %p72, %p73
      %p75 = scmp.ne.s32.totalorder %s64, %s67
      %p76 = scmp.eq.s32.totalorder %s19, 1
      %p77 = por %p75, %p76
      %p78 = scmp.ne.s32.totalorder %s67, %s68
      %p79 = scmp.eq.s32.totalorder %s19, 0
      %p80 = por %p78, %p79
      %p81 = scmp.ne.s32.totalorder %s67, %s68
      %p82 = scmp.eq.s32.totalorder %s20, 1
      %p83 = por %p81, %p82
      %p85 = scmp.ne.s32.totalorder %s68, %s84
      %p86 = scmp.eq.s32.totalorder %s20, 0
      %p87 = por %p85, %p86
      %s89 = sadd.s32 %s88, 1
      %p92 = scmp.eq.s32.totalorder %s14, 1
      %p93 = scmp.ne.s32.totalorder %s88, %s90
      %p94 = scmp.eq.s32.totalorder %s14, 0
      %p95 = por %p93, %p94
      %p96 = scmp.ne.s32.totalorder %s88, %s90
      %p97 = scmp.eq.s32.totalorder %s19, 1
      %p98 = por %p96, %p97
      %p99 = scmp.ne.s32.totalorder %s90, %s91
      %p100 = scmp.eq.s32.totalorder %s19, 0
      %p101 = por %p99, %p100
      %p102 = scmp.ne.s32.totalorder %s90, %s91
      %p103 = scmp.eq.s32.totalorder %s20, 1
      %p104 = por %p102, %p103
      %p106 = scmp.ne.s32.totalorder %s91, %s105
      %p107 = scmp.eq.s32.totalorder %s20, 0
      %p108 = por %p106, %p107
      %s110 = sadd.s32 %s109, 1
      %p113 = scmp.eq.s32.totalorder %s14, 1
      %p114 = scmp.ne.s32.totalorder %s109, %s111
      %p115 = scmp.eq.s32.totalorder %s14, 0
      %p116 = por %p114, %p115
      %p117 = scmp.ne.s32.totalorder %s109, %s111
      %p118 = scmp.eq.s32.totalorder %s19, 1
      %p119 = por %p117, %p118
      %p120 = scmp.ne.s32.totalorder %s111, %s112
      %p121 = scmp.eq.s32.totalorder %s19, 0
      %p122 = por %p120, %p121
      %p123 = scmp.ne.s32.totalorder %s111, %s112
      %p124 = scmp.eq.s32.totalorder %s20, 1
      %p125 = por %p123, %p124
      %p127 = scmp.ne.s32.totalorder %s112, %s126
      %p128 = scmp.eq.s32.totalorder %s20, 0
      %p129 = por %p127, %p128
      %s131 = sadd.s32 %s130, 1
      %p134 = scmp.eq.s32.totalorder %s14, 1
      %p135 = scmp.ne.s32.totalorder %s130, %s132
      %p136 = scmp.eq.s32.totalorder %s14, 0
      %p137 = por %p135, %p136
      %p138 = scmp.ne.s32.totalorder %s130, %s132
      %p139 = scmp.eq.s32.totalorder %s19, 1
      %p140 = por %p138, %p139
      %p141 = scmp.ne.s32.totalorder %s132, %s133
      %p142 = scmp.eq.s32.totalorder %s19, 0
      %p143 = por %p141, %p142
      %p144 = scmp.ne.s32.totalorder %s132, %s133
      %p145 = scmp.eq.s32.totalorder %s20, 1
      %p146 = por %p144, %p145
      %p148 = scmp.ne.s32.totalorder %s133, %s147
      %p149 = scmp.eq.s32.totalorder %s20, 0
      %p150 = por %p148, %p149
      %s151 = ssub.s32 %s21, %s33
      %s152 = ssub.s32 %s22, %s29
      %s153 = sor.u32 %s151, %s152
      %p154 = scmp.eq.s32.totalorder %s153, 0
      %s156 = sadd.s32 %s155, 1
      %s157 = scalar_select %p154, %s155, %s156
      %p160 = pneg %p154
      %p161 = scmp.eq.s32.totalorder %s14, 1
      %p162 = por %p160, %p161
      %p163 = scmp.ne.s32.totalorder %s155, %s158
      %p164 = scmp.eq.s32.totalorder %s14, 0
      %p165 = por %p163, %p164
      %p166 = scmp.ne.s32.totalorder %s155, %s158
      %p167 = scmp.eq.s32.totalorder %s19, 1
      %p168 = por %p166, %p167
      %p169 = scmp.ne.s32.totalorder %s158, %s159
      %p170 = scmp.eq.s32.totalorder %s19, 0
      %p171 = por %p169, %p170
      %p172 = scmp.ne.s32.totalorder %s158, %s159
      %p173 = scmp.eq.s32.totalorder %s20, 1
      %p174 = por %p172, %p173
      %p176 = scmp.ne.s32.totalorder %s159, %s175
      %p177 = scmp.eq.s32.totalorder %s20, 0
      %p178 = por %p176, %p177
      %p179 = scmp.le.s32.totalorder 1, %s14
      %p180 = scmp.lt.s32.totalorder %s14, 3
      %p181 = pnand %p179, %p180
      %p182 = pneg %p181
      // Predicated region
      $region9: #{tpu_custom_call.1} parent=5 // pred_check
        _
      $region10: #{tpu_custom_call.1} parent=5 // pred_check_branch
        %184 = sbr.rel (%p181) target = $region12
      $region11: #{tpu_custom_call.1} parent=5 // pred_region
        %s185 = ssub.s32 %s14, 1
        // Predicated region
        $region13: #{tpu_custom_call.1} parent=11 // pred_check
          %p186 = pneg %p101
        $region14: #{tpu_custom_call.1} parent=11 // pred_check_branch
          %188 = sbr.rel (%p186) target = $region16
        $region15: #{tpu_custom_call.1} parent=11 // pred_region
          _
        $region16: #{tpu_custom_call.1} parent=11 // pred_fallthru
          _
        // Predicated region
        $region17: #{tpu_custom_call.1} parent=11 // pred_check
          %p189 = pneg %p122
        $region18: #{tpu_custom_call.1} parent=11 // pred_check_branch
          %191 = sbr.rel (%p189) target = $region20
        $region19: #{tpu_custom_call.1} parent=11 // pred_region
          _
        $region20: #{tpu_custom_call.1} parent=11 // pred_fallthru
          _
        // Predicated region
        $region21: #{tpu_custom_call.1} parent=11 // pred_check
          %p192 = pneg %p143
        $region22: #{tpu_custom_call.1} parent=11 // pred_check_branch
          %194 = sbr.rel (%p192) target = $region24
        $region23: #{tpu_custom_call.1} parent=11 // pred_region
          _
        $region24: #{tpu_custom_call.1} parent=11 // pred_fallthru
          _
      $region12: #{tpu_custom_call.1} parent=5 // pred_fallthru
        _
      %p195 = scmp.lt.s32.totalorder %s14, 2
      // Predicated region
      $region25: #{tpu_custom_call.1} parent=5 // pred_check
        %p196 = pneg %p195
      $region26: #{tpu_custom_call.1} parent=5 // pred_check_branch
        %198 = sbr.rel (%p196) target = $region28
      $region27: #{tpu_custom_call.1} parent=5 // pred_region
        // Predicated region
        $region29: #{tpu_custom_call.1} parent=27 // pred_check
          %p199 = pneg %p48
        $region30: #{tpu_custom_call.1} parent=27 // pred_check_branch
          %201 = sbr.rel (%p199) target = $region32
        $region31: #{tpu_custom_call.1} parent=27 // pred_region
          %s202 = smul.u32 4, %s22
          %p203 = scmp.lt.s32.totalorder %s21, 1
          %s204 = scalar_select %p203, %s21, 1
          %p205 = scmp.lt.s32.totalorder %s202, 3
          %s206 = scalar_select %p205, %s202, 3
          %s207 = smul.addr %s204, 4
          %s208 = sadd.s32 %s206, %s207
          %s209 = smul.addr %s208, 8
          %s210 = scalar_lea.vmem %s0, %s209
          %s211 = smul.u32 4, %s22
        $region32: #{tpu_custom_call.1} parent=27 // pred_fallthru
          _
        // Predicated region
        $region33: #{tpu_custom_call.1} parent=27 // pred_check
          %p212 = pneg %p74
        $region34: #{tpu_custom_call.1} parent=27 // pred_check_branch
          %214 = sbr.rel (%p212) target = $region36
        $region35: #{tpu_custom_call.1} parent=27 // pred_region
          %p215 = scmp.lt.s32.totalorder %s21, 1
          %s216 = scalar_select %p215, %s21, 1
          %s217 = smul.addr %s216, 8
          %s218 = scalar_lea.vmem %s1, %s217
        $region36: #{tpu_custom_call.1} parent=27 // pred_fallthru
          _
      $region28: #{tpu_custom_call.1} parent=5 // pred_fallthru
        _
      %p219 = scmp.le.s32.totalorder 1, %s14
      %p220 = scmp.lt.s32.totalorder %s14, 3
      %p221 = pnand %p219, %p220
      %p222 = pneg %p221
      // Predicated region
      $region37: #{tpu_custom_call.1} parent=5 // pred_check
        _
      $region38: #{tpu_custom_call.1} parent=5 // pred_check_branch
        %224 = sbr.rel (%p221) target = $region40
      $region39: #{tpu_custom_call.1} parent=5 // pred_region
        %s225 = ssub.s32 %s14, 1
        %s226 = smul.u32 4, %s24
        %p227 = scmp.lt.s32.totalorder %s23, 1
        %s228 = scalar_select %p227, %s23, 1
        %p229 = scmp.lt.s32.totalorder %s226, 3
        %s230 = scalar_select %p229, %s226, 3
        %s231 = smul.addr %s228, 4
        %s232 = sadd.s32 %s230, %s231
        %s233 = smul.addr %s232, 8
        %s234 = scalar_lea.vmem %s0, %s233
        %p235 = pneg %p54
        %p236 = pneg %p51
        %p237 = scmp.lt.s32.totalorder %s23, 1
        %s238 = scalar_select %p237, %s23, 1
        %s239 = smul.addr %s238, 8
        %s240 = scalar_lea.vmem %s1, %s239
        %p241 = pneg %p80
        %p242 = pneg %p77
        %p243 = pneg %p101
        %p244 = pneg %p98
        %p245 = pneg %p122
        %p246 = pneg %p119
        %p247 = pneg %p143
        %p248 = pneg %p140
        %p249 = pneg %p171
        %p250 = pneg %p168
        %s251 = sand.u32 %s158, 1
        %s252 = scalar_lea.sflag [#allocation3], %s251
        %s253 = sand.u32 %s158, 1
        %s254 = smul.addr %s253, 32
        %s255 = scalar_lea.vmem [#allocation2], %s254
        %s256 = smul.u32 4, %s24
        %p257 = scmp.lt.s32.totalorder %s23, 1
        %s258 = scalar_select %p257, %s23, 1
        %p259 = scmp.lt.s32.totalorder %s256, 3
        %s260 = scalar_select %p259, %s256, 3
        %s261 = smul.addr %s258, 4
        %s262 = sadd.s32 %s260, %s261
        %s263 = smul.addr %s262, 8
        %s264 = scalar_lea.vmem %s0, %s263
        %s265 = smul.u32 4, %s24
        %p266 = scmp.lt.s32.totalorder %s23, 1
        %s267 = scalar_select %p266, %s23, 1
        %s268 = smul.addr %s267, 8
        %s269 = scalar_lea.vmem %s1, %s268
        %s270 = smul.u32 4, %s24
        %v272 = vld [vmem:[%s264] sm:$0xff]
        %v273 = vld [vmem:[%s264 + $0x8] sm:$0xff]
        %v274 = vld [vmem:[%s264 + $0x10] sm:$0xff]
        %v275 = vld [vmem:[%s264 + $0x18] sm:$0xff]
        %v276 = vand.u32 %v272, 65535
        %v277 = vand.u32 %v273, 65535
        %v278 = vand.u32 %v274, 65535
        %v279 = vand.u32 %v275, 65535
        %v280 = vshra.s32 %v272, 16
        %v281 = vshra.s32 %v273, 16
        %v282 = vshra.s32 %v274, 16
        %v283 = vshra.s32 %v275, 16
        %v284 = vlaneseq
        %v285 = vand.u32 %v284, 127
        %286 = vset.pattern.permute.xlu0 0
        %287 = vperm.xlu0 %286, %v276
        %v288 = vpop.permute.xlu0 %287
        %289 = vset.pattern.permute.xlu0 0
        %290 = vperm.xlu0 %289, %v277
        %v291 = vpop.permute.xlu0 %290
        %292 = vset.pattern.permute.xlu0 0
        %293 = vperm.xlu0 %292, %v278
        %v294 = vpop.permute.xlu0 %293
        %295 = vset.pattern.permute.xlu0 0
        %296 = vperm.xlu0 %295, %v279
        %v297 = vpop.permute.xlu0 %296
        %vm298 = vcmp.eq.s32.totalorder %v285, %v288
        %vm299 = vcmp.eq.s32.totalorder %v285, %v291
        %vm300 = vcmp.eq.s32.totalorder %v285, %v294
        %vm301 = vcmp.eq.s32.totalorder %v285, %v297
        %302 = vset.pattern.permute.xlu0 0
        %303 = vperm.xlu0 %302, %v280
        %v304 = vpop.permute.xlu0 %303
        %305 = vset.pattern.permute.xlu0 0
        %306 = vperm.xlu0 %305, %v281
        %v307 = vpop.permute.xlu0 %306
        %308 = vset.pattern.permute.xlu0 0
        %309 = vperm.xlu0 %308, %v282
        %v310 = vpop.permute.xlu0 %309
        %311 = vset.pattern.permute.xlu0 0
        %312 = vperm.xlu0 %311, %v283
        %v313 = vpop.permute.xlu0 %312
        %vm314 = vcmp.eq.s32.totalorder %v285, %v304
        %vm315 = vcmp.eq.s32.totalorder %v285, %v307
        %vm316 = vcmp.eq.s32.totalorder %v285, %v310
        %vm317 = vcmp.eq.s32.totalorder %v285, %v313
        %vm318 = vmor %vm298, %vm314
        %vm319 = vmor %vm299, %vm315
        %vm320 = vmor %vm300, %vm316
        %vm321 = vmor %vm301, %vm317
        %v322 = vsel %vm318, 1, 0
        %v323 = vsel %vm319, 1, 0
        %v324 = vsel %vm320, 1, 0
        %v325 = vsel %vm321, 1, 0
        %v326 = vcvt.s32.f32 %v322
        %v327 = vcvt.s32.f32 %v323
        %v328 = vcvt.s32.f32 %v324
        %v329 = vcvt.s32.f32 %v325
        %v330 = vpack.c.bf16 %v327, %v326
        %v331 = vpack.c.bf16 %v329, %v328
        %v332 = vld [vmem:[%s2] sm:$0xf]
        %v333 = vld [vmem:[%s2 + $0x4] sm:$0xf]
        %v334 = vld [vmem:[%s2 + $0x8] sm:$0xf]
        %v335 = vld [vmem:[%s2 + $0xc] sm:$0xf]
        %v336 = vld [vmem:[%s2 + $0x10] sm:$0xf]
        %v337 = vld [vmem:[%s2 + $0x14] sm:$0x3]
        %v338 = vld [vmem:[%s3] sm:$0xf]
        %v339 = vld [vmem:[%s3 + $0x4] sm:$0xf]
        %v340 = vld [vmem:[%s3 + $0x8] sm:$0xf]
        %v341 = vld [vmem:[%s3 + $0xc] sm:$0xf]
        %v342 = vld [vmem:[%s3 + $0x10] sm:$0xf]
        %v343 = vld [vmem:[%s3 + $0x14] sm:$0x3]
        %v350 = vunpack.c.l.b16 %v338
        %v351 = vunpack.c.l.b16 %v339
        %v352 = vunpack.c.l.b16 %v340
        %v353 = vunpack.c.l.b16 %v341
        %v354 = vunpack.c.l.b16 %v342
        %v355 = vunpack.c.l.b16 %v343
        %v356 = vpack.c.b16 %v351, %v350
        %v357 = vpack.c.b16 %v353, %v352
        %v358 = vpack.c.b16 %v355, %v354
        %vm361 = vcmask 359424
        %v363 = vsel %vm361, %v330, 0
        %v366 = vsel %vm361, %v331, 0
        %vm368 = vcmask 1045504
        %v370 = vsel %vm368, %v358, 0
        %372 = vmatprep.subr.bf16.mxu0 0
        %373 = vmatpush1.bf16.msra.mxu0 %v356
        %374 = vmatprep.subr.bf16.mxu0 0
        %375 = vmatpush1.bf16.msra.mxu0 %v357
        %376 = vmatprep.subr.bf16.mxu0 0
        %377 = vmatpush1.bf16.msra.mxu0 %v370
        %378 = vmatprep.subr.bf16.mxu0 0
        %379 = vmatpush1.bf16.msra.mxu0 0
        %380 = vmatprep.subr.bf16.mxu0 0
        %381 = vmatpush1.bf16.msra.mxu0 0
        %382 = vmatprep.subr.bf16.mxu0 0
        %383 = vmatpush1.bf16.msra.mxu0 0
        %384 = vmatprep.subr.bf16.mxu0 0
        %385 = vmatpush1.bf16.msra.mxu0 0
        %386 = vmatprep.subr.bf16.mxu0 0
        %387 = vmatpush1.bf16.msra.mxu0 0
        %388 = vmatprep.subr.bf16.mxu0 0
        %389 = vmatpush1.bf16.msra.mxu0 0
        %390 = vmatprep.subr.bf16.mxu0 0
        %391 = vmatpush1.bf16.msra.mxu0 0
        %392 = vmatprep.subr.bf16.mxu0 0
        %393 = vmatpush1.bf16.msra.mxu0 0
        %394 = vmatprep.subr.bf16.mxu0 0
        %395 = vmatpush1.bf16.msra.mxu0 0
        %396 = vmatprep.subr.bf16.mxu0 0
        %397 = vmatpush1.bf16.msra.mxu0 0
        %398 = vmatprep.subr.bf16.mxu0 0
        %399 = vmatpush1.bf16.msra.mxu0 0
        %400 = vmatprep.subr.bf16.mxu0 0
        %401 = vmatpush1.bf16.msra.mxu0 0
        %402 = vmatprep.subr.bf16.mxu0 0
        %403 = vmatpush1.bf16.msra.mxu0 0
        %404 = vmatprep.mubr.bf16.mxu0 0
        %405 = vmatmul.mubr.bf16.gmra.mrb[0].mxu0 %v363
        %v406 = vpop.f32.mrb[0].mxu0
        %v407 = vadd.f32 0.0, %v406
        %v408 = vpop.f32.mrb[0].mxu0
        %v409 = vpop.f32.mrb[0].mxu0
        %v410 = vadd.f32 0.0, %v409
        %v411 = vpop.f32.mrb[0].mxu0
        %412 = vmatprep.mubr.bf16.mxu0 0
        %413 = vmatmul.mubr.bf16.gmra.mrb[0].mxu0 %v366
        %v414 = vpop.f32.mrb[0].mxu0
        %v415 = vadd.f32 0.0, %v414
        %v416 = vpop.f32.mrb[0].mxu0
        %v417 = vpop.f32.mrb[0].mxu0
        %v418 = vadd.f32 0.0, %v417
        %v419 = vpop.f32.mrb[0].mxu0
        %420 = vdwg.mxu0
        %v427 = vunpack.c.l.b16 %v332
        %v428 = vunpack.c.l.b16 %v333
        %v429 = vunpack.c.l.b16 %v334
        %v430 = vunpack.c.l.b16 %v335
        %v431 = vunpack.c.l.b16 %v336
        %v432 = vunpack.c.l.b16 %v337
        %v433 = vpack.c.b16 %v428, %v427
        %v434 = vpack.c.b16 %v430, %v429
        %v435 = vpack.c.b16 %v432, %v431
        %v439 = vsel %vm368, %v435, 0
        %441 = vmatprep.subr.bf16.mxu0 0
        %442 = vmatpush1.bf16.msra.mxu0 %v433
        %443 = vmatprep.subr.bf16.mxu0 0
        %444 = vmatpush1.bf16.msra.mxu0 %v434
        %445 = vmatprep.subr.bf16.mxu0 0
        %446 = vmatpush1.bf16.msra.mxu0 %v439
        %447 = vmatprep.subr.bf16.mxu0 0
        %448 = vmatpush1.bf16.msra.mxu0 0
        %449 = vmatprep.subr.bf16.mxu0 0
        %450 = vmatpush1.bf16.msra.mxu0 0
        %451 = vmatprep.subr.bf16.mxu0 0
        %452 = vmatpush1.bf16.msra.mxu0 0
        %453 = vmatprep.subr.bf16.mxu0 0
        %454 = vmatpush1.bf16.msra.mxu0 0
        %455 = vmatprep.subr.bf16.mxu0 0
        %456 = vmatpush1.bf16.msra.mxu0 0
        %457 = vmatprep.subr.bf16.mxu0 0
        %458 = vmatpush1.bf16.msra.mxu0 0
        %459 = vmatprep.subr.bf16.mxu0 0
        %460 = vmatpush1.bf16.msra.mxu0 0
        %461 = vmatprep.subr.bf16.mxu0 0
        %462 = vmatpush1.bf16.msra.mxu0 0
        %463 = vmatprep.subr.bf16.mxu0 0
        %464 = vmatpush1.bf16.msra.mxu0 0
        %465 = vmatprep.subr.bf16.mxu0 0
        %466 = vmatpush1.bf16.msra.mxu0 0
        %467 = vmatprep.subr.bf16.mxu0 0
        %468 = vmatpush1.bf16.msra.mxu0 0
        %469 = vmatprep.subr.bf16.mxu0 0
        %470 = vmatpush1.bf16.msra.mxu0 0
        %471 = vmatprep.subr.bf16.mxu0 0
        %472 = vmatpush1.bf16.msra.mxu0 0
        %473 = vmatprep.mubr.bf16.mxu0 0
        %474 = vmatmul.mubr.bf16.gmra.mrb[0].mxu0 %v363
        %v475 = vpop.f32.mrb[0].mxu0
        %v476 = vadd.f32 %v407, %v475
        %v477 = vpop.f32.mrb[0].mxu0
        %v478 = vpop.f32.mrb[0].mxu0
        %v479 = vadd.f32 %v410, %v478
        %v480 = vpop.f32.mrb[0].mxu0
        %481 = vmatprep.mubr.bf16.mxu0 0
        %482 = vmatmul.mubr.bf16.gmra.mrb[0].mxu0 %v366
        %v483 = vpop.f32.mrb[0].mxu0
        %v484 = vadd.f32 %v415, %v483
        %v485 = vpop.f32.mrb[0].mxu0
        %v486 = vpop.f32.mrb[0].mxu0
        %v487 = vadd.f32 %v418, %v486
        %v488 = vpop.f32.mrb[0].mxu0
        %489 = vdwg.mxu0
        %v490 = vld [vmem:[%s269] sm:$0xff]
        %v491 = vadd.f32 %v476, %v490
        %v492 = vadd.f32 %v479, %v490
        %v493 = vadd.f32 %v484, %v490
        %v494 = vadd.f32 %v487, %v490
        %495 = vst [vmem:[%s255] sm:$0xff] %v491
        %496 = vst [vmem:[%s255 + $0x8] sm:$0xff] %v492
        %497 = vst [vmem:[%s255 + $0x10] sm:$0xff] %v493
        %498 = vst [vmem:[%s255 + $0x18] sm:$0xff] %v494
        %p499 = scmp.eq.s32.totalorder %s24, 0
        // Predicated region
        $region41: #{tpu_custom_call.1} parent=39 // pred_check
          %p500 = pneg %p499
        $region42: #{tpu_custom_call.1} parent=39 // pred_check_branch
          %502 = sbr.rel (%p500) target = $region44
        $region43: #{tpu_custom_call.1} parent=39 // pred_region
          %v503 = vld [vmem:[%s4] sm:$0x1]
          %v505 = vlaneseq
          %v506 = vshrl.u32 %v505, 7
          %v507 = vsub.s32 0, %v506
          %v508 = vrot.slane %v503, %v507
          %v510 = vadd.f32 %v491, %v508
          %511 = vst [vmem:[%s255] sm:$0xff] %v510
        $region44: #{tpu_custom_call.1} parent=39 // pred_fallthru
          _
        %s512 = sand.u32 %s158, 1
        %s513 = scalar_lea.sflag [#allocation3], %s512
        %s514 = sand.u32 %s158, 1
        %s515 = smul.addr %s514, 32
        %s516 = scalar_lea.vmem [#allocation2], %s515
        // Predicated region
        $region45: #{tpu_custom_call.1} parent=39 // pred_check
          %p517 = pneg %p168
        $region46: #{tpu_custom_call.1} parent=39 // pred_check_branch
          %519 = sbr.rel (%p517) target = $region48
        $region47: #{tpu_custom_call.1} parent=39 // pred_region
          %s520 = smul.u32 4, %s24
          %s522 = ssub.s32 512, 512
          %523 = vsyncadd %s513, %s522
          %s524 = smul.addr %s23, 4
          %s525 = sadd.s32 %s520, %s524
          %s526 = smul.addr %s525, 128
          %s527 = scalar_lea.hbm %s5, %s526
          %s528 = sshll.u32 %s516, 4
          %s529 = int_to_ptr.vmem [resolvable:$true] %s528
          %534 = dma.vmem_to_hbm [thread:$0]  %s529, 512, %s527, %s513, 128, 128, 8
        $region48: #{tpu_custom_call.1} parent=39 // pred_fallthru
          _
      $region40: #{tpu_custom_call.1} parent=5 // pred_fallthru
        _
      %p535 = scmp.le.s32.totalorder 2, %s14
      // Predicated region
      $region49: #{tpu_custom_call.1} parent=5 // pred_check
        %p536 = pneg %p535
      $region50: #{tpu_custom_call.1} parent=5 // pred_check_branch
        %538 = sbr.rel (%p536) target = $region52
      $region51: #{tpu_custom_call.1} parent=5 // pred_region
        %s539 = ssub.s32 %s14, 2
        // Predicated region
        $region53: #{tpu_custom_call.1} parent=51 // pred_check
          %p540 = pneg %p174
        $region54: #{tpu_custom_call.1} parent=51 // pred_check_branch
          %542 = sbr.rel (%p540) target = $region56
        $region55: #{tpu_custom_call.1} parent=51 // pred_region
          %s543 = sand.u32 %s159, 1
          %s544 = scalar_lea.sflag [#allocation3], %s543
          %s545 = sand.u32 %s159, 1
          %s546 = smul.addr %s545, 32
          %s547 = scalar_lea.vmem [#allocation2], %s546
          %548 = dma.done %s544, 512
        $region56: #{tpu_custom_call.1} parent=51 // pred_fallthru
          _
      $region52: #{tpu_custom_call.1} parent=5 // pred_fallthru
        _
    $region6: #{tpu_custom_call.1} parent=1 // loop_footer
      %s18 = sadd.s32 1, %s14
    $region7: #{tpu_custom_call.1} parent=1 // loop_footer_branch
      %13 = sbr.rel target = $region3
    $region8: #{tpu_custom_call.1} parent=1 // loop_exit
      _
    %549 = vsyncpa [#allocation3], 1
    %s550 = scalar_lea.sflag [#allocation3], 1
    %551 = vsyncpa %s550, 1

</llo_original>
